<compile_context>
chip_gen: v5e
topology: v5e:2x2
jax: 0.10.0
libtpu: 0.0.40
codegen_flags: <defaults>
</compile_context>

<pallas_src>
import functools

import jax
import jax.numpy as jnp
from jax import lax
from jax.experimental import pallas as pl
from jax.experimental.pallas import tpu as pltpu

EPS = 1e-5


# ----------------------------- Pallas kernel -------------------------------

def _taps_3x3_reflect(a, W, masks):
    """Stack the 9 taps of a 3x3 'same' reflect-padded conv into one operand.

    a      : (C, P) f32, P = N*H*W flattened with w fastest, C multiple of 8.
    masks  : (w==0, w==W-1, h==0, h==H-1) boundary masks, each (1, P) bool.
    returns: (9*C, P) f32, row index = t*C + c with t = (dy+1)*3 + (dx+1).
    """
    C, P = a.shape
    mw0, mwL, mh0, mhL = masks
    # Pre-broadcast each mask to the operand row count once and reuse.
    bw0 = jnp.broadcast_to(mw0, (C, P))
    bwL = jnp.broadcast_to(mwL, (C, P))
    bh0 = jnp.broadcast_to(mh0, (C, P))
    bhL = jnp.broadcast_to(mhL, (C, P))

    # h-direction shifts (+-W lanes) with reflection at h = 0 / H-1.
    a_pW = pltpu.roll(a, W, axis=1)        # out[p] = a[p - W]  -> source h-1
    a_mW = pltpu.roll(a, P - W, axis=1)    # out[p] = a[p + W]  -> source h+1
    row_m = jnp.where(bh0, a_mW, a_pW)     # dy = -1 (reflect at h == 0)
    row_p = jnp.where(bhL, a_pW, a_mW)     # dy = +1 (reflect at h == H-1)

    taps = []
    for r in (row_m, a, row_p):            # dy = -1, 0, +1
        r_p1 = pltpu.roll(r, 1, axis=1)        # out[p] = r[p - 1] -> source w-1
        r_m1 = pltpu.roll(r, P - 1, axis=1)    # out[p] = r[p + 1] -> source w+1
        taps.append(jnp.where(bw0, r_m1, r_p1))   # dx = -1 (reflect at w == 0)
        taps.append(r)                            # dx =  0
        taps.append(jnp.where(bwL, r_p1, r_m1))   # dx = +1 (reflect at w == W-1)
    # All chunks are C (multiple of 8) f32 rows -> aligned sublane-tile concat.
    return jnp.concatenate(taps, axis=0)   # (9*C, P)


def _batchnorm(acc, gamma, beta):
    """Training-mode BatchNorm over the P axis (single pass, fused reduction)."""
    C, P = acc.shape
    # One lane reduction for both sum and sum-of-squares.
    stacked = jnp.concatenate([acc, acc * acc], axis=0)        # (2C, P)
    s = jnp.sum(stacked, axis=1, keepdims=True) * (1.0 / P)    # (2C, 1)
    mean = s[:C]
    mean_sq = s[C:]
    var = mean_sq - mean * mean
    scale = gamma * lax.rsqrt(var + EPS)
    shift = beta - mean * scale
    return acc * scale + shift


def resblock_kernel(x_ref, w1_ref, w2_ref, g1_ref, b1_ref, g2_ref, b2_ref,
                    out_ref, *, H, W):
    Cout, P = out_ref.shape
    x = x_ref[...]                                   # (Cin_p, P) f32

    # Reflect boundary masks from an in-kernel iota (no edges DMA).
    pos = lax.broadcasted_iota(jnp.int32, (1, P), 1)
    if (W & (W - 1)) == 0 and (H & (H - 1)) == 0:
        wi = jnp.bitwise_and(pos, W - 1)
        hi = jnp.bitwise_and(jnp.right_shift(pos, (W - 1).bit_length()), H - 1)
    else:
        wi = pos % W
        hi = (pos // W) % H
    masks = (wi == 0, wi == W - 1, hi == 0, hi == H - 1)

    # conv1 (3x3 reflect) with the 1x1 downsample folded in: ONE MXU matmul.
    taps1 = _taps_3x3_reflect(x, W, masks)                          # (9*Cin_p, P)
    r1 = jnp.dot(w1_ref[...], taps1.astype(jnp.bfloat16),
                 preferred_element_type=jnp.float32)                # (2*Cout, P)
    acc1 = r1[:Cout]
    ident = r1[Cout:]

    # BN1 + ReLU (all f32; y1 never leaves VMEM).
    y1 = jnp.maximum(_batchnorm(acc1, g1_ref[...], b1_ref[...]), 0.0)

    # conv2 (3x3 reflect): ONE MXU matmul.
    taps2 = _taps_3x3_reflect(y1, W, masks)                         # (9*Cout, P)
    acc2 = jnp.dot(w2_ref[...], taps2.astype(jnp.bfloat16),
                   preferred_element_type=jnp.float32)              # (Cout, P)
    y2 = _batchnorm(acc2, g2_ref[...], b2_ref[...])

    # Residual add + final ReLU, lane-dense full-width store.
    out_ref[...] = jnp.maximum(y2 + ident, 0.0)

    # TODO(synk): upsample / dropout / instance-norm / stride!=1 branches are
    # disabled in this configuration and are not implemented.


# ------------------------------- wrapper ------------------------------------

@jax.jit
def resblock_forward(x_nchw, w1, w2, wd, gamma1, beta1, gamma2, beta2):
    N, Cin, H, W = x_nchw.shape
    Cout, _, K, _ = w1.shape
    assert K == 3
    P = N * H * W
    Cin_p = ((Cin + 7) // 8) * 8          # pad channels to an aligned 8-row tile

    # Lane-dense activation layout: channels on sublanes, flat N*H*W on lanes.
    x_cp = jnp.transpose(x_nchw, (1, 0, 2, 3)).reshape(Cin, P).astype(jnp.float32)
    x_cp = jnp.pad(x_cp, ((0, Cin_p - Cin), (0, 0)))

    # PyTorch (Cout, Cin, kH, kW) -> (Cout, 9, Cin_p); column = t*Cin_p + c,
    # tap t = (dy+1)*3 + (dx+1).  The 1x1 downsample becomes Cout extra output
    # rows that only touch the centre-tap (t = 4) columns.
    w1_r = jnp.zeros((Cout, K * K, Cin_p), jnp.float32)
    w1_r = w1_r.at[:, :, :Cin].set(jnp.transpose(w1, (0, 2, 3, 1)).reshape(Cout, K * K, Cin))
    wd_r = jnp.zeros((Cout, K * K, Cin_p), jnp.float32)
    wd_r = wd_r.at[:, 4, :Cin].set(wd[:, :, 0, 0])
    w1_stack = jnp.concatenate([w1_r, wd_r], axis=0)
    w1_stack = w1_stack.reshape(2 * Cout, K * K * Cin_p).astype(jnp.bfloat16)

    w2_stack = jnp.transpose(w2, (0, 2, 3, 1)).reshape(Cout, K * K * Cout)
    w2_stack = w2_stack.astype(jnp.bfloat16)

    g1 = gamma1.reshape(Cout, 1).astype(jnp.float32)
    b1 = beta1.reshape(Cout, 1).astype(jnp.float32)
    g2 = gamma2.reshape(Cout, 1).astype(jnp.float32)
    b2 = beta2.reshape(Cout, 1).astype(jnp.float32)

    out_cp = pl.pallas_call(
        functools.partial(resblock_kernel, H=H, W=W),
        out_shape=jax.ShapeDtypeStruct((Cout, P), jnp.float32),
        in_specs=[pl.BlockSpec(memory_space=pltpu.MemorySpace.VMEM)
                  for _ in range(7)],
        out_specs=pl.BlockSpec(memory_space=pltpu.MemorySpace.VMEM),
    )(x_cp, w1_stack, w2_stack, g1, b1, g2, b2)

    # (Cout, P) -> NCHW public boundary (matches PyTorch).
    return jnp.transpose(out_cp.reshape(Cout, N, H, W), (1, 0, 2, 3))


# --------------------------- pure-JAX reference ------------------------------

def reflect_pad(x_nhwc, p):
    return jnp.pad(x_nhwc, ((0, 0), (p, p), (p, p), (0, 0)), mode="reflect")


def ref_resblock(x_nchw, w1, w2, wd, gamma1, beta1, gamma2, beta2):
    x = jnp.transpose(x_nchw, (0, 2, 3, 1))
    K = w1.shape[2]
    p = (K - 1) // 2

    def conv(inp, w):
        w_hwio = jnp.transpose(w, (2, 3, 1, 0))
        return lax.conv_general_dilated(inp, w_hwio, (1, 1), "VALID",
                                        dimension_numbers=("NHWC", "HWIO", "NHWC"))

    def bn(y, g, b):
        mean = jnp.mean(y, axis=(0, 1, 2), keepdims=True)
        var = jnp.mean((y - mean) ** 2, axis=(0, 1, 2), keepdims=True)
        return (y - mean) * lax.rsqrt(var + EPS) * g + b

    y = conv(reflect_pad(x, p), w1)
    y = jnp.maximum(bn(y, gamma1, beta1), 0.0)
    y = conv(reflect_pad(y, p), w2)
    y = bn(y, gamma2, beta2)
    ident = conv(x, wd)                                          # 1x1 downsample
    out = jnp.maximum(y + ident, 0.0)
    return jnp.transpose(out, (0, 3, 1, 2))


# --------------------------------- main --------------------------------------

if __name__ == "__main__":
    N, Cin, Cout, H, W, K = 2, 4, 8, 16, 16, 3

    key = jax.random.PRNGKey(0)
    kx, k1, k2, kd = jax.random.split(key, 4)

    x = jax.random.normal(kx, (N, Cin, H, W), jnp.float32)

    # kaiming_normal_ (fan_in, relu gain): std = sqrt(2 / fan_in)
    w1 = jax.random.normal(k1, (Cout, Cin, K, K), jnp.float32) * (2.0 / (Cin * K * K)) ** 0.5
    w2 = jax.random.normal(k2, (Cout, Cout, K, K), jnp.float32) * (2.0 / (Cout * K * K)) ** 0.5
    wd = jax.random.normal(kd, (Cout, Cin, 1, 1), jnp.float32) * (1.0 / Cin) ** 0.5

    # BatchNorm2d affine defaults: weight=1, bias=0
    gamma1 = jnp.ones((Cout,), jnp.float32)
    beta1 = jnp.zeros((Cout,), jnp.float32)
    gamma2 = jnp.ones((Cout,), jnp.float32)
    beta2 = jnp.zeros((Cout,), jnp.float32)

    out = resblock_forward(x, w1, w2, wd, gamma1, beta1, gamma2, beta2)
    out = jax.block_until_ready(out)

    ref = ref_resblock(x, w1, w2, wd, gamma1, beta1, gamma2, beta2)
    assert out.shape == (N, Cout, H, W), out.shape
    assert jnp.allclose(out, ref, atol=5e-2, rtol=5e-2), \
        float(jnp.max(jnp.abs(out - ref)))

    print("KERNEL_OK")
</pallas_src>

<mosaic_0001>
module attributes {stable_mosaic.version = 11 : i64} {
  func.func @resblock_kernel(%arg0: memref<8x512xf32, #tpu.memory_space<vmem>>, %arg1: memref<16x72xbf16, #tpu.memory_space<vmem>>, %arg2: memref<8x72xbf16, #tpu.memory_space<vmem>>, %arg3: memref<8x1xf32, #tpu.memory_space<vmem>>, %arg4: memref<8x1xf32, #tpu.memory_space<vmem>>, %arg5: memref<8x1xf32, #tpu.memory_space<vmem>>, %arg6: memref<8x1xf32, #tpu.memory_space<vmem>>, %arg7: memref<8x512xf32, #tpu.memory_space<vmem>>) attributes {dimension_semantics = [], scalar_prefetch = 0 : i64, scratch_operands = 0 : i64, tpu.core_type = #tpu.core_type<tc>} {
    %c0 = arith.constant 0 : index
    %c0_0 = arith.constant 0 : index
    %0 = vector.load %arg0[%c0, %c0_0] : memref<8x512xf32, #tpu.memory_space<vmem>>, vector<8x512xf32>
    %1 = tpu.iota {dimensions = array<i32: 1>} : vector<1x512xi32>
    %c15_i32 = arith.constant 15 : i32
    %2 = vector.broadcast %c15_i32 : i32 to vector<1x512xi32>
    %3 = arith.andi %1, %2 : vector<1x512xi32>
    %c4_i32 = arith.constant 4 : i32
    %4 = vector.broadcast %c4_i32 : i32 to vector<1x512xi32>
    %5 = arith.shrsi %1, %4 : vector<1x512xi32>
    %c15_i32_1 = arith.constant 15 : i32
    %6 = vector.broadcast %c15_i32_1 : i32 to vector<1x512xi32>
    %7 = arith.andi %5, %6 : vector<1x512xi32>
    %c0_i32 = arith.constant 0 : i32
    %8 = vector.broadcast %c0_i32 : i32 to vector<1x512xi32>
    %9 = arith.cmpi eq, %3, %8 : vector<1x512xi32>
    %c15_i32_2 = arith.constant 15 : i32
    %10 = vector.broadcast %c15_i32_2 : i32 to vector<1x512xi32>
    %11 = arith.cmpi eq, %3, %10 : vector<1x512xi32>
    %c0_i32_3 = arith.constant 0 : i32
    %12 = vector.broadcast %c0_i32_3 : i32 to vector<1x512xi32>
    %13 = arith.cmpi eq, %7, %12 : vector<1x512xi32>
    %c15_i32_4 = arith.constant 15 : i32
    %14 = vector.broadcast %c15_i32_4 : i32 to vector<1x512xi32>
    %15 = arith.cmpi eq, %7, %14 : vector<1x512xi32>
    %16 = vector.shape_cast %9 : vector<1x512xi1> to vector<1x512xi1>
    %17 = vector.broadcast %16 : vector<1x512xi1> to vector<8x512xi1>
    %18 = vector.shape_cast %11 : vector<1x512xi1> to vector<1x512xi1>
    %19 = vector.broadcast %18 : vector<1x512xi1> to vector<8x512xi1>
    %20 = vector.shape_cast %13 : vector<1x512xi1> to vector<1x512xi1>
    %21 = vector.broadcast %20 : vector<1x512xi1> to vector<8x512xi1>
    %22 = vector.shape_cast %15 : vector<1x512xi1> to vector<1x512xi1>
    %23 = vector.broadcast %22 : vector<1x512xi1> to vector<8x512xi1>
    %c16_i32 = arith.constant 16 : i32
    %24 = tpu.dynamic_rotate %0 by %c16_i32 dim 1 : vector<8x512xf32>, i32 -> vector<8x512xf32>
    %c496_i32 = arith.constant 496 : i32
    %25 = tpu.dynamic_rotate %0 by %c496_i32 dim 1 : vector<8x512xf32>, i32 -> vector<8x512xf32>
    %26 = arith.select %21, %25, %24 : vector<8x512xi1>, vector<8x512xf32>
    %27 = arith.select %23, %24, %25 : vector<8x512xi1>, vector<8x512xf32>
    %c1_i32 = arith.constant 1 : i32
    %28 = tpu.dynamic_rotate %26 by %c1_i32 dim 1 : vector<8x512xf32>, i32 -> vector<8x512xf32>
    %c511_i32 = arith.constant 511 : i32
    %29 = tpu.dynamic_rotate %26 by %c511_i32 dim 1 : vector<8x512xf32>, i32 -> vector<8x512xf32>
    %30 = arith.select %17, %29, %28 : vector<8x512xi1>, vector<8x512xf32>
    %31 = arith.select %19, %28, %29 : vector<8x512xi1>, vector<8x512xf32>
    %c1_i32_5 = arith.constant 1 : i32
    %32 = tpu.dynamic_rotate %0 by %c1_i32_5 dim 1 : vector<8x512xf32>, i32 -> vector<8x512xf32>
    %c511_i32_6 = arith.constant 511 : i32
    %33 = tpu.dynamic_rotate %0 by %c511_i32_6 dim 1 : vector<8x512xf32>, i32 -> vector<8x512xf32>
    %34 = arith.select %17, %33, %32 : vector<8x512xi1>, vector<8x512xf32>
    %35 = arith.select %19, %32, %33 : vector<8x512xi1>, vector<8x512xf32>
    %c1_i32_7 = arith.constant 1 : i32
    %36 = tpu.dynamic_rotate %27 by %c1_i32_7 dim 1 : vector<8x512xf32>, i32 -> vector<8x512xf32>
    %c511_i32_8 = arith.constant 511 : i32
    %37 = tpu.dynamic_rotate %27 by %c511_i32_8 dim 1 : vector<8x512xf32>, i32 -> vector<8x512xf32>
    %38 = arith.select %17, %37, %36 : vector<8x512xi1>, vector<8x512xf32>
    %39 = arith.select %19, %36, %37 : vector<8x512xi1>, vector<8x512xf32>
    %40 = tpu.concatenate %30, %26, %31, %34, %0, %35, %38, %27, %39 in 0 : vector<8x512xf32>, vector<8x512xf32>, vector<8x512xf32>, vector<8x512xf32>, vector<8x512xf32>, vector<8x512xf32>, vector<8x512xf32>, vector<8x512xf32>, vector<8x512xf32> -> vector<72x512xf32>
    %c0_9 = arith.constant 0 : index
    %c0_10 = arith.constant 0 : index
    %41 = vector.load %arg1[%c0_9, %c0_10] : memref<16x72xbf16, #tpu.memory_space<vmem>>, vector<16x72xbf16>
    %42 = arith.truncf %40 : vector<72x512xf32> to vector<72x512xbf16>
    %cst = arith.constant dense<0.000000e+00> : vector<16x512xf32>
    %43 = tpu.matmul %41, %42, %cst {dimension_numbers = #tpu.dot_dimension_numbers<[1], [0], [0], [1], [0, 0, 1, 1], [], []>} : vector<16x72xbf16>, vector<72x512xbf16>, vector<16x512xf32> -> vector<16x512xf32>
    %44 = vector.extract_strided_slice %43 {offsets = [0, 0], sizes = [8, 512], strides = [1, 1]} : vector<16x512xf32> to vector<8x512xf32>
    %45 = vector.extract_strided_slice %43 {offsets = [8, 0], sizes = [8, 512], strides = [1, 1]} : vector<16x512xf32> to vector<8x512xf32>
    %c0_11 = arith.constant 0 : index
    %c0_12 = arith.constant 0 : index
    %46 = vector.load %arg3[%c0_11, %c0_12] : memref<8x1xf32, #tpu.memory_space<vmem>>, vector<8x1xf32>
    %c0_13 = arith.constant 0 : index
    %c0_14 = arith.constant 0 : index
    %47 = vector.load %arg4[%c0_13, %c0_14] : memref<8x1xf32, #tpu.memory_space<vmem>>, vector<8x1xf32>
    %48 = arith.mulf %44, %44 : vector<8x512xf32>
    %49 = tpu.concatenate %44, %48 in 0 : vector<8x512xf32>, vector<8x512xf32> -> vector<16x512xf32>
    %cst_15 = arith.constant dense<0.000000e+00> : vector<16xf32>
    %50 = vector.multi_reduction <add>, %49, %cst_15 [1] : vector<16x512xf32> to vector<16xf32>
    %51 = vector.shape_cast %50 : vector<16xf32> to vector<16x1xf32>
    %cst_16 = arith.constant 0.001953125 : f32
    %52 = vector.broadcast %cst_16 : f32 to vector<16x1xf32>
    %53 = arith.mulf %51, %52 : vector<16x1xf32>
    %54 = vector.extract_strided_slice %53 {offsets = [0, 0], sizes = [8, 1], strides = [1, 1]} : vector<16x1xf32> to vector<8x1xf32>
    %55 = vector.extract_strided_slice %53 {offsets = [8, 0], sizes = [8, 1], strides = [1, 1]} : vector<16x1xf32> to vector<8x1xf32>
    %56 = arith.mulf %54, %54 : vector<8x1xf32>
    %57 = arith.subf %55, %56 : vector<8x1xf32>
    %cst_17 = arith.constant 9.99999974E-6 : f32
    %58 = vector.broadcast %cst_17 : f32 to vector<8x1xf32>
    %59 = arith.addf %57, %58 : vector<8x1xf32>
    %60 = math.rsqrt %59 : vector<8x1xf32>
    %61 = arith.mulf %46, %60 : vector<8x1xf32>
    %62 = arith.mulf %54, %61 : vector<8x1xf32>
    %63 = arith.subf %47, %62 : vector<8x1xf32>
    %64 = vector.broadcast %61 : vector<8x1xf32> to vector<8x512xf32>
    %65 = arith.mulf %44, %64 : vector<8x512xf32>
    %66 = vector.broadcast %63 : vector<8x1xf32> to vector<8x512xf32>
    %67 = arith.addf %65, %66 : vector<8x512xf32>
    %cst_18 = arith.constant 0.000000e+00 : f32
    %68 = vector.broadcast %cst_18 : f32 to vector<8x512xf32>
    %69 = arith.maximumf %67, %68 : vector<8x512xf32>
    %70 = vector.shape_cast %9 : vector<1x512xi1> to vector<1x512xi1>
    %71 = vector.broadcast %70 : vector<1x512xi1> to vector<8x512xi1>
    %72 = vector.shape_cast %11 : vector<1x512xi1> to vector<1x512xi1>
    %73 = vector.broadcast %72 : vector<1x512xi1> to vector<8x512xi1>
    %74 = vector.shape_cast %13 : vector<1x512xi1> to vector<1x512xi1>
    %75 = vector.broadcast %74 : vector<1x512xi1> to vector<8x512xi1>
    %76 = vector.shape_cast %15 : vector<1x512xi1> to vector<1x512xi1>
    %77 = vector.broadcast %76 : vector<1x512xi1> to vector<8x512xi1>
    %c16_i32_19 = arith.constant 16 : i32
    %78 = tpu.dynamic_rotate %69 by %c16_i32_19 dim 1 : vector<8x512xf32>, i32 -> vector<8x512xf32>
    %c496_i32_20 = arith.constant 496 : i32
    %79 = tpu.dynamic_rotate %69 by %c496_i32_20 dim 1 : vector<8x512xf32>, i32 -> vector<8x512xf32>
    %80 = arith.select %75, %79, %78 : vector<8x512xi1>, vector<8x512xf32>
    %81 = arith.select %77, %78, %79 : vector<8x512xi1>, vector<8x512xf32>
    %c1_i32_21 = arith.constant 1 : i32
    %82 = tpu.dynamic_rotate %80 by %c1_i32_21 dim 1 : vector<8x512xf32>, i32 -> vector<8x512xf32>
    %c511_i32_22 = arith.constant 511 : i32
    %83 = tpu.dynamic_rotate %80 by %c511_i32_22 dim 1 : vector<8x512xf32>, i32 -> vector<8x512xf32>
    %84 = arith.select %71, %83, %82 : vector<8x512xi1>, vector<8x512xf32>
    %85 = arith.select %73, %82, %83 : vector<8x512xi1>, vector<8x512xf32>
    %c1_i32_23 = arith.constant 1 : i32
    %86 = tpu.dynamic_rotate %69 by %c1_i32_23 dim 1 : vector<8x512xf32>, i32 -> vector<8x512xf32>
    %c511_i32_24 = arith.constant 511 : i32
    %87 = tpu.dynamic_rotate %69 by %c511_i32_24 dim 1 : vector<8x512xf32>, i32 -> vector<8x512xf32>
    %88 = arith.select %71, %87, %86 : vector<8x512xi1>, vector<8x512xf32>
    %89 = arith.select %73, %86, %87 : vector<8x512xi1>, vector<8x512xf32>
    %c1_i32_25 = arith.constant 1 : i32
    %90 = tpu.dynamic_rotate %81 by %c1_i32_25 dim 1 : vector<8x512xf32>, i32 -> vector<8x512xf32>
    %c511_i32_26 = arith.constant 511 : i32
    %91 = tpu.dynamic_rotate %81 by %c511_i32_26 dim 1 : vector<8x512xf32>, i32 -> vector<8x512xf32>
    %92 = arith.select %71, %91, %90 : vector<8x512xi1>, vector<8x512xf32>
    %93 = arith.select %73, %90, %91 : vector<8x512xi1>, vector<8x512xf32>
    %94 = tpu.concatenate %84, %80, %85, %88, %69, %89, %92, %81, %93 in 0 : vector<8x512xf32>, vector<8x512xf32>, vector<8x512xf32>, vector<8x512xf32>, vector<8x512xf32>, vector<8x512xf32>, vector<8x512xf32>, vector<8x512xf32>, vector<8x512xf32> -> vector<72x512xf32>
    %c0_27 = arith.constant 0 : index
    %c0_28 = arith.constant 0 : index
    %95 = vector.load %arg2[%c0_27, %c0_28] : memref<8x72xbf16, #tpu.memory_space<vmem>>, vector<8x72xbf16>
    %96 = arith.truncf %94 : vector<72x512xf32> to vector<72x512xbf16>
    %cst_29 = arith.constant dense<0.000000e+00> : vector<8x512xf32>
    %97 = tpu.matmul %95, %96, %cst_29 {dimension_numbers = #tpu.dot_dimension_numbers<[1], [0], [0], [1], [0, 0, 1, 1], [], []>} : vector<8x72xbf16>, vector<72x512xbf16>, vector<8x512xf32> -> vector<8x512xf32>
    %c0_30 = arith.constant 0 : index
    %c0_31 = arith.constant 0 : index
    %98 = vector.load %arg5[%c0_30, %c0_31] : memref<8x1xf32, #tpu.memory_space<vmem>>, vector<8x1xf32>
    %c0_32 = arith.constant 0 : index
    %c0_33 = arith.constant 0 : index
    %99 = vector.load %arg6[%c0_32, %c0_33] : memref<8x1xf32, #tpu.memory_space<vmem>>, vector<8x1xf32>
    %100 = arith.mulf %97, %97 : vector<8x512xf32>
    %101 = tpu.concatenate %97, %100 in 0 : vector<8x512xf32>, vector<8x512xf32> -> vector<16x512xf32>
    %cst_34 = arith.constant dense<0.000000e+00> : vector<16xf32>
    %102 = vector.multi_reduction <add>, %101, %cst_34 [1] : vector<16x512xf32> to vector<16xf32>
    %103 = vector.shape_cast %102 : vector<16xf32> to vector<16x1xf32>
    %cst_35 = arith.constant 0.001953125 : f32
    %104 = vector.broadcast %cst_35 : f32 to vector<16x1xf32>
    %105 = arith.mulf %103, %104 : vector<16x1xf32>
    %106 = vector.extract_strided_slice %105 {offsets = [0, 0], sizes = [8, 1], strides = [1, 1]} : vector<16x1xf32> to vector<8x1xf32>
    %107 = vector.extract_strided_slice %105 {offsets = [8, 0], sizes = [8, 1], strides = [1, 1]} : vector<16x1xf32> to vector<8x1xf32>
    %108 = arith.mulf %106, %106 : vector<8x1xf32>
    %109 = arith.subf %107, %108 : vector<8x1xf32>
    %cst_36 = arith.constant 9.99999974E-6 : f32
    %110 = vector.broadcast %cst_36 : f32 to vector<8x1xf32>
    %111 = arith.addf %109, %110 : vector<8x1xf32>
    %112 = math.rsqrt %111 : vector<8x1xf32>
    %113 = arith.mulf %98, %112 : vector<8x1xf32>
    %114 = arith.mulf %106, %113 : vector<8x1xf32>
    %115 = arith.subf %99, %114 : vector<8x1xf32>
    %116 = vector.broadcast %113 : vector<8x1xf32> to vector<8x512xf32>
    %117 = arith.mulf %97, %116 : vector<8x512xf32>
    %118 = vector.broadcast %115 : vector<8x1xf32> to vector<8x512xf32>
    %119 = arith.addf %117, %118 : vector<8x512xf32>
    %120 = arith.addf %119, %45 : vector<8x512xf32>
    %cst_37 = arith.constant 0.000000e+00 : f32
    %121 = vector.broadcast %cst_37 : f32 to vector<8x512xf32>
    %122 = arith.maximumf %120, %121 : vector<8x512xf32>
    %c0_38 = arith.constant 0 : index
    %c0_39 = arith.constant 0 : index
    %123 = vector.load %arg7[%c0_38, %c0_39] : memref<8x512xf32, #tpu.memory_space<vmem>>, vector<8x512xf32>
    tpu.vector_store %arg7[%c0_38, %c0_39], %122 {strides = array<i32>} : memref<8x512xf32, #tpu.memory_space<vmem>>, vector<8x512xf32>,
    return
  }
}

</mosaic_0001>

<llo_original>
// kernel: resblock_forward.1
$region0: #{resblock_forward.1}
  #allocation0 [shape = 'u32[]', space=smem, size = 0x4, offset = 0x4, fixed_abs, tag = 'smem constant byte address 0x4 - core index']
  #allocation1 [shape = 'u32[72,128]{1,0:T(1,128)}', space=vmem, size = 0x9000, scoped, tag = 'internal scratch']
  %s0 = inlined_call_operand.vmem [shape: f32[8,512], index: 0, kind: input, shape index: {}]
  %s1 = inlined_call_operand.vmem [shape: bf16[16,72], index: 1, kind: input, shape index: {}]
  %s2 = inlined_call_operand.vmem [shape: bf16[8,72], index: 2, kind: input, shape index: {}]
  %s3 = inlined_call_operand.vmem [shape: f32[8,1], index: 3, kind: input, shape index: {}]
  %s4 = inlined_call_operand.vmem [shape: f32[8,1], index: 4, kind: input, shape index: {}]
  %s5 = inlined_call_operand.vmem [shape: f32[8,1], index: 5, kind: input, shape index: {}]
  %s6 = inlined_call_operand.vmem [shape: f32[8,1], index: 6, kind: input, shape index: {}]
  %s7 = inlined_call_operand.vmem [shape: f32[8,512], index: 7, kind: output, shape index: {}]
  %s8 = sld [smem:[#allocation0]]
  $region38: #{resblock_forward.1} parent=0
    _
  %s10 = ssub.s32 1, %s8
  %s11 = scalar_select 0, %s10, %s8
  // Predicated region
  $region2: #{resblock_forward.1} parent=0 // pred_check
    _
  $region3: #{resblock_forward.1} parent=0 // pred_check_branch
    %13 = sbr.rel (0) target = $region5
  $region4: #{resblock_forward.1} parent=0 // pred_region
    _
  $region5: #{resblock_forward.1} parent=0 // pred_fallthru
    _
  // Predicated region
  $region6: #{resblock_forward.1} parent=0 // pred_check
    _
  $region7: #{resblock_forward.1} parent=0 // pred_check_branch
    %15 = sbr.rel (0) target = $region9
  $region8: #{resblock_forward.1} parent=0 // pred_region
    _
  $region9: #{resblock_forward.1} parent=0 // pred_fallthru
    _
  // Predicated region
  $region10: #{resblock_forward.1} parent=0 // pred_check
    _
  $region11: #{resblock_forward.1} parent=0 // pred_check_branch
    %17 = sbr.rel (0) target = $region13
  $region12: #{resblock_forward.1} parent=0 // pred_region
    _
  $region13: #{resblock_forward.1} parent=0 // pred_fallthru
    _
  // Predicated region
  $region14: #{resblock_forward.1} parent=0 // pred_check
    _
  $region15: #{resblock_forward.1} parent=0 // pred_check_branch
    %19 = sbr.rel (0) target = $region17
  $region16: #{resblock_forward.1} parent=0 // pred_region
    _
  $region17: #{resblock_forward.1} parent=0 // pred_fallthru
    _
  // Predicated region
  $region18: #{resblock_forward.1} parent=0 // pred_check
    _
  $region19: #{resblock_forward.1} parent=0 // pred_check_branch
    %21 = sbr.rel (0) target = $region21
  $region20: #{resblock_forward.1} parent=0 // pred_region
    _
  $region21: #{resblock_forward.1} parent=0 // pred_fallthru
    _
  // Predicated region
  $region22: #{resblock_forward.1} parent=0 // pred_check
    _
  $region23: #{resblock_forward.1} parent=0 // pred_check_branch
    %23 = sbr.rel (0) target = $region25
  $region24: #{resblock_forward.1} parent=0 // pred_region
    _
  $region25: #{resblock_forward.1} parent=0 // pred_fallthru
    _
  // Predicated region
  $region26: #{resblock_forward.1} parent=0 // pred_check
    _
  $region27: #{resblock_forward.1} parent=0 // pred_check_branch
    %25 = sbr.rel (0) target = $region29
  $region28: #{resblock_forward.1} parent=0 // pred_region
    _
  $region29: #{resblock_forward.1} parent=0 // pred_fallthru
    _
  %v27 = vld [vmem:[%s0] sm:$0xff]
  %v28 = vld [vmem:[%s0 + $0x8] sm:$0xff]
  %v29 = vld [vmem:[%s0 + $0x10] sm:$0xff]
  %v30 = vld [vmem:[%s0 + $0x18] sm:$0xff]
  %v31 = vlaneseq
  %v32 = vand.u32 %v31, 127
  %v33 = vadd.s32 %v32, 128
  %v34 = vadd.s32 %v32, 256
  %v35 = vadd.s32 %v32, 384
  %v36 = vand.u32 %v32, 15
  %v37 = vand.u32 %v33, 15
  %v38 = vand.u32 %v34, 15
  %v39 = vand.u32 %v35, 15
  %v40 = vshra.s32 %v32, 4
  %v41 = vshra.s32 %v33, 4
  %v42 = vshra.s32 %v34, 4
  %v43 = vshra.s32 %v35, 4
  %v44 = vand.u32 %v40, 15
  %v45 = vand.u32 %v41, 15
  %v46 = vand.u32 %v42, 15
  %v47 = vand.u32 %v43, 15
  %vm48 = vcmp.eq.s32.totalorder %v36, 0
  %vm49 = vcmp.eq.s32.totalorder %v37, 0
  %vm50 = vcmp.eq.s32.totalorder %v38, 0
  %vm51 = vcmp.eq.s32.totalorder %v39, 0
  %vm52 = vcmp.eq.s32.totalorder %v36, 15
  %vm53 = vcmp.eq.s32.totalorder %v37, 15
  %vm54 = vcmp.eq.s32.totalorder %v38, 15
  %vm55 = vcmp.eq.s32.totalorder %v39, 15
  %vm56 = vcmp.eq.s32.totalorder %v44, 0
  %vm57 = vcmp.eq.s32.totalorder %v45, 0
  %vm58 = vcmp.eq.s32.totalorder %v46, 0
  %vm59 = vcmp.eq.s32.totalorder %v47, 0
  %vm60 = vcmp.eq.s32.totalorder %v44, 15
  %vm61 = vcmp.eq.s32.totalorder %v45, 15
  %vm62 = vcmp.eq.s32.totalorder %v46, 15
  %vm63 = vcmp.eq.s32.totalorder %v47, 15
  %v64 = vsel %vm48, 1, 0
  %v65 = vsel %vm49, 1, 0
  %v66 = vsel %vm50, 1, 0
  %v67 = vsel %vm51, 1, 0
  %vm68 = vcmp.eq.s32.totalorder %v64, 1
  %vm69 = vcmp.eq.s32.totalorder %v65, 1
  %vm70 = vcmp.eq.s32.totalorder %v66, 1
  %vm71 = vcmp.eq.s32.totalorder %v67, 1
  %v72 = vsel %vm52, 1, 0
  %v73 = vsel %vm53, 1, 0
  %v74 = vsel %vm54, 1, 0
  %v75 = vsel %vm55, 1, 0
  %vm76 = vcmp.eq.s32.totalorder %v72, 1
  %vm77 = vcmp.eq.s32.totalorder %v73, 1
  %vm78 = vcmp.eq.s32.totalorder %v74, 1
  %vm79 = vcmp.eq.s32.totalorder %v75, 1
  %v80 = vsel %vm56, 1, 0
  %v81 = vsel %vm57, 1, 0
  %v82 = vsel %vm58, 1, 0
  %v83 = vsel %vm59, 1, 0
  %vm84 = vcmp.eq.s32.totalorder %v80, 1
  %vm85 = vcmp.eq.s32.totalorder %v81, 1
  %vm86 = vcmp.eq.s32.totalorder %v82, 1
  %vm87 = vcmp.eq.s32.totalorder %v83, 1
  %v88 = vsel %vm60, 1, 0
  %v89 = vsel %vm61, 1, 0
  %v90 = vsel %vm62, 1, 0
  %v91 = vsel %vm63, 1, 0
  %vm92 = vcmp.eq.s32.totalorder %v88, 1
  %vm93 = vcmp.eq.s32.totalorder %v89, 1
  %vm94 = vcmp.eq.s32.totalorder %v90, 1
  %vm95 = vcmp.eq.s32.totalorder %v91, 1
  %96 = vrot.lane.b32.xlu0 %v27, 16
  %v97 = vpop.permute.xlu0 %96
  %98 = vrot.lane.b32.xlu0 %v28, 16
  %v99 = vpop.permute.xlu0 %98
  %100 = vrot.lane.b32.xlu0 %v29, 16
  %v101 = vpop.permute.xlu0 %100
  %102 = vrot.lane.b32.xlu0 %v30, 16
  %v103 = vpop.permute.xlu0 %102
  %vm104 = vcmp.lt.s32.totalorder %v32, 16
  %v105 = vsel %vm104, %v101, %v103
  %v106 = vsel %vm104, %v99, %v101
  %v107 = vsel %vm104, %v97, %v99
  %v108 = vsel %vm104, %v103, %v97
  %109 = vrot.lane.b32.xlu0 %v27, 112
  %v110 = vpop.permute.xlu0 %109
  %111 = vrot.lane.b32.xlu0 %v28, 112
  %v112 = vpop.permute.xlu0 %111
  %113 = vrot.lane.b32.xlu0 %v29, 112
  %v114 = vpop.permute.xlu0 %113
  %115 = vrot.lane.b32.xlu0 %v30, 112
  %v116 = vpop.permute.xlu0 %115
  %vm117 = vcmp.lt.s32.totalorder %v32, 112
  %v118 = vsel %vm117, %v114, %v116
  %v119 = vsel %vm117, %v112, %v114
  %v120 = vsel %vm117, %v110, %v112
  %v121 = vsel %vm117, %v116, %v110
  %v122 = vsel %vm84, %v120, %v108
  %v123 = vsel %vm85, %v119, %v107
  %v124 = vsel %vm86, %v118, %v106
  %v125 = vsel %vm87, %v121, %v105
  %v126 = vsel %vm92, %v108, %v120
  %v127 = vsel %vm93, %v107, %v119
  %v128 = vsel %vm94, %v106, %v118
  %v129 = vsel %vm95, %v105, %v121
  %130 = vrot.lane.b32.xlu0 %v122, 1
  %v131 = vpop.permute.xlu0 %130
  %132 = vrot.lane.b32.xlu0 %v123, 1
  %v133 = vpop.permute.xlu0 %132
  %134 = vrot.lane.b32.xlu0 %v124, 1
  %v135 = vpop.permute.xlu0 %134
  %136 = vrot.lane.b32.xlu0 %v125, 1
  %v137 = vpop.permute.xlu0 %136
  %vm138 = vcmp.lt.s32.totalorder %v32, 1
  %v139 = vsel %vm138, %v135, %v137
  %v140 = vsel %vm138, %v133, %v135
  %v141 = vsel %vm138, %v131, %v133
  %v142 = vsel %vm138, %v137, %v131
  %143 = vrot.lane.b32.xlu0 %v122, 127
  %v144 = vpop.permute.xlu0 %143
  %145 = vrot.lane.b32.xlu0 %v123, 127
  %v146 = vpop.permute.xlu0 %145
  %147 = vrot.lane.b32.xlu0 %v124, 127
  %v148 = vpop.permute.xlu0 %147
  %149 = vrot.lane.b32.xlu0 %v125, 127
  %v150 = vpop.permute.xlu0 %149
  %vm151 = vcmp.lt.s32.totalorder %v32, 127
  %v152 = vsel %vm151, %v148, %v150
  %v153 = vsel %vm151, %v146, %v148
  %v154 = vsel %vm151, %v144, %v146
  %v155 = vsel %vm151, %v150, %v144
  %v156 = vsel %vm68, %v154, %v142
  %v157 = vsel %vm69, %v153, %v141
  %v158 = vsel %vm70, %v152, %v140
  %v159 = vsel %vm71, %v155, %v139
  %v160 = vsel %vm76, %v142, %v154
  %v161 = vsel %vm77, %v141, %v153
  %v162 = vsel %vm78, %v140, %v152
  %v163 = vsel %vm79, %v139, %v155
  %164 = vrot.lane.b32.xlu0 %v27, 1
  %v165 = vpop.permute.xlu0 %164
  %166 = vrot.lane.b32.xlu0 %v28, 1
  %v167 = vpop.permute.xlu0 %166
  %168 = vrot.lane.b32.xlu0 %v29, 1
  %v169 = vpop.permute.xlu0 %168
  %170 = vrot.lane.b32.xlu0 %v30, 1
  %v171 = vpop.permute.xlu0 %170
  %v172 = vsel %vm138, %v169, %v171
  %v173 = vsel %vm138, %v167, %v169
  %v174 = vsel %vm138, %v165, %v167
  %v175 = vsel %vm138, %v171, %v165
  %176 = vrot.lane.b32.xlu0 %v27, 127
  %v177 = vpop.permute.xlu0 %176
  %178 = vrot.lane.b32.xlu0 %v28, 127
  %v179 = vpop.permute.xlu0 %178
  %180 = vrot.lane.b32.xlu0 %v29, 127
  %v181 = vpop.permute.xlu0 %180
  %182 = vrot.lane.b32.xlu0 %v30, 127
  %v183 = vpop.permute.xlu0 %182
  %v184 = vsel %vm151, %v181, %v183
  %v185 = vsel %vm151, %v179, %v181
  %v186 = vsel %vm151, %v177, %v179
  %v187 = vsel %vm151, %v183, %v177
  %v188 = vsel %vm68, %v186, %v175
  %v189 = vsel %vm69, %v185, %v174
  %v190 = vsel %vm70, %v184, %v173
  %v191 = vsel %vm71, %v187, %v172
  %v192 = vsel %vm76, %v175, %v186
  %v193 = vsel %vm77, %v174, %v185
  %v194 = vsel %vm78, %v173, %v184
  %v195 = vsel %vm79, %v172, %v187
  %196 = vrot.lane.b32.xlu0 %v126, 1
  %v197 = vpop.permute.xlu0 %196
  %198 = vrot.lane.b32.xlu0 %v127, 1
  %v199 = vpop.permute.xlu0 %198
  %200 = vrot.lane.b32.xlu0 %v128, 1
  %v201 = vpop.permute.xlu0 %200
  %202 = vrot.lane.b32.xlu0 %v129, 1
  %v203 = vpop.permute.xlu0 %202
  %v204 = vsel %vm138, %v201, %v203
  %v205 = vsel %vm138, %v199, %v201
  %v206 = vsel %vm138, %v197, %v199
  %v207 = vsel %vm138, %v203, %v197
  %208 = vrot.lane.b32.xlu0 %v126, 127
  %v209 = vpop.permute.xlu0 %208
  %210 = vrot.lane.b32.xlu0 %v127, 127
  %v211 = vpop.permute.xlu0 %210
  %212 = vrot.lane.b32.xlu0 %v128, 127
  %v213 = vpop.permute.xlu0 %212
  %214 = vrot.lane.b32.xlu0 %v129, 127
  %v215 = vpop.permute.xlu0 %214
  %v216 = vsel %vm151, %v213, %v215
  %v217 = vsel %vm151, %v211, %v213
  %v218 = vsel %vm151, %v209, %v211
  %v219 = vsel %vm151, %v215, %v209
  %v220 = vsel %vm68, %v218, %v207
  %v221 = vsel %vm69, %v217, %v206
  %v222 = vsel %vm70, %v216, %v205
  %v223 = vsel %vm71, %v219, %v204
  %v224 = vsel %vm76, %v207, %v218
  %v225 = vsel %vm77, %v206, %v217
  %v226 = vsel %vm78, %v205, %v216
  %v227 = vsel %vm79, %v204, %v219
  %v228 = vld [vmem:[%s1] sm:$0xf]
  %v229 = vld [vmem:[%s1 + $0x4] sm:$0xf]
  %v230 = vpack.c.bf16 %v122, %v156
  %v231 = vpack.c.bf16 %v123, %v157
  %v232 = vpack.c.bf16 %v124, %v158
  %v233 = vpack.c.bf16 %v125, %v159
  %v234 = vpack.c.bf16 %v188, %v160
  %v235 = vpack.c.bf16 %v189, %v161
  %v236 = vpack.c.bf16 %v190, %v162
  %v237 = vpack.c.bf16 %v191, %v163
  %v238 = vpack.c.bf16 %v192, %v27
  %v239 = vpack.c.bf16 %v193, %v28
  %v240 = vpack.c.bf16 %v194, %v29
  %v241 = vpack.c.bf16 %v195, %v30
  %v242 = vpack.c.bf16 %v126, %v220
  %v243 = vpack.c.bf16 %v127, %v221
  %v244 = vpack.c.bf16 %v128, %v222
  %v245 = vpack.c.bf16 %v129, %v223
  %v246 = vpack.c.bf16 %v224, %v224
  %v247 = vpack.c.bf16 %v225, %v225
  %v248 = vpack.c.bf16 %v226, %v226
  %v249 = vpack.c.bf16 %v227, %v227
  %v252 = vunpack.c.l.b16 %v228
  %v253 = vunpack.c.l.b16 %v229
  %v254 = vpack.c.b16 %v253, %v252
  %vm255 = vcmask 588800
  %v257 = vsel %vm255, %v254, 0
  %vm259 = vcmask 1043456
  %v261 = vsel %vm259, %v246, 0
  %v264 = vsel %vm259, %v247, 0
  %v267 = vsel %vm259, %v248, 0
  %v270 = vsel %vm259, %v249, 0
  %272 = vmatpush.bf16.msra.mxu0 0
  %273 = vmatpush.bf16.msra.mxu0 0
  %274 = vmatpush.bf16.msra.mxu0 0
  %275 = vmatpush.bf16.msra.mxu0 %v261
  %276 = vmatpush.bf16.msra.mxu0 %v242
  %277 = vmatpush.bf16.msra.mxu0 %v238
  %278 = vmatpush.bf16.msra.mxu0 %v234
  %279 = vmatpush.bf16.msra.mxu0 %v230
  %280 = vmatmul.bf16.gmra.mxu0 %v257
  %v281 = vpop.f32.mrf.mxu0
  %v282 = vadd.f32 0.0, %v281
  %v283 = vpop.f32.mrf.mxu0
  %v284 = vadd.f32 0.0, %v283
  %285 = vdwg.mxu0
  %286 = vmatpush.bf16.msra.mxu0 0
  %287 = vmatpush.bf16.msra.mxu0 0
  %288 = vmatpush.bf16.msra.mxu0 0
  %289 = vmatpush.bf16.msra.mxu0 %v264
  %290 = vmatpush.bf16.msra.mxu0 %v243
  %291 = vmatpush.bf16.msra.mxu0 %v239
  %292 = vmatpush.bf16.msra.mxu0 %v235
  %293 = vmatpush.bf16.msra.mxu0 %v231
  %294 = vmatmul.bf16.gmra.mxu0 %v257
  %v295 = vpop.f32.mrf.mxu0
  %v296 = vadd.f32 0.0, %v295
  %v297 = vpop.f32.mrf.mxu0
  %v298 = vadd.f32 0.0, %v297
  %299 = vdwg.mxu0
  %300 = vmatpush.bf16.msra.mxu0 0
  %301 = vmatpush.bf16.msra.mxu0 0
  %302 = vmatpush.bf16.msra.mxu0 0
  %303 = vmatpush.bf16.msra.mxu0 %v267
  %304 = vmatpush.bf16.msra.mxu0 %v244
  %305 = vmatpush.bf16.msra.mxu0 %v240
  %306 = vmatpush.bf16.msra.mxu0 %v236
  %307 = vmatpush.bf16.msra.mxu0 %v232
  %308 = vmatmul.bf16.gmra.mxu0 %v257
  %v309 = vpop.f32.mrf.mxu0
  %v310 = vadd.f32 0.0, %v309
  %v311 = vpop.f32.mrf.mxu0
  %v312 = vadd.f32 0.0, %v311
  %313 = vdwg.mxu0
  %314 = vmatpush.bf16.msra.mxu0 0
  %315 = vmatpush.bf16.msra.mxu0 0
  %316 = vmatpush.bf16.msra.mxu0 0
  %317 = vmatpush.bf16.msra.mxu0 %v270
  %318 = vmatpush.bf16.msra.mxu0 %v245
  %319 = vmatpush.bf16.msra.mxu0 %v241
  %320 = vmatpush.bf16.msra.mxu0 %v237
  %321 = vmatpush.bf16.msra.mxu0 %v233
  %322 = vmatmul.bf16.gmra.mxu0 %v257
  %v323 = vpop.f32.mrf.mxu0
  %v324 = vadd.f32 0.0, %v323
  %v325 = vpop.f32.mrf.mxu0
  %v326 = vadd.f32 0.0, %v325
  %327 = vdwg.mxu0
  %v328 = vld [vmem:[%s3] sm:$0xff]
  %v329 = vld [vmem:[%s4] sm:$0xff]
  %v330 = vmul.f32 %v282, %v282
  %v331 = vmul.f32 %v296, %v296
  %v332 = vmul.f32 %v310, %v310
  %v333 = vmul.f32 %v324, %v324
  %v334 = vadd.f32 %v282, %v296
  %v335 = vadd.f32 %v334, %v310
  %v336 = vadd.f32 %v335, %v324
  %337 = vadd.xlane.f32.xlu0 %v336
  %v338 = vpop.xlane.xlu0 %337
  %v339 = vadd.f32 %v330, %v331
  %v340 = vadd.f32 %v339, %v332
  %v341 = vadd.f32 %v340, %v333
  %342 = vadd.xlane.f32.xlu0 %v341
  %v343 = vpop.xlane.xlu0 %342
  %v344 = vmul.f32 %v338, 0.001953125
  %v345 = vmul.f32 %v343, 0.001953125
  %v346 = vmul.f32 %v344, %v344
  %v347 = vsub.f32 %v345, %v346
  %v348 = vadd.f32 %v347, 1e-05
  %v349 = vrsqrt.pop %v348
  %v350 = vmul.f32 %v349, %v348
  %v351 = vmul.f32 %v350, %v349
  %v352 = vmul.f32 0.5, %v351
  %v353 = vsub.f32 1.5, %v352
  %v354 = vmul.f32 %v349, %v353
  %vm355 = vweird.f32 %v348
  %vm356 = vweird.f32 %v349
  %vm357 = vmor %vm355, %vm356
  %v358 = vsel %vm357, %v349, %v354
  %v359 = vmul.f32 %v328, %v358
  %v360 = vmul.f32 %v344, %v359
  %v361 = vsub.f32 %v329, %v360
  %363 = vset.pattern.permute.xlu0 0
  %364 = vperm.xlu0 %363, %v359
  %v365 = vpop.permute.xlu0 %364
  %v367 = vmul.f32 %v282, %v365
  %v368 = vmul.f32 %v296, %v365
  %v369 = vmul.f32 %v310, %v365
  %v370 = vmul.f32 %v324, %v365
  %372 = vset.pattern.permute.xlu0 0
  %373 = vperm.xlu0 %372, %v361
  %v374 = vpop.permute.xlu0 %373
  %v376 = vadd.f32 %v367, %v374
  %v377 = vadd.f32 %v368, %v374
  %v378 = vadd.f32 %v369, %v374
  %v379 = vadd.f32 %v370, %v374
  %v380 = vmax.f32 %v376, 0.0
  %v381 = vmax.f32 %v377, 0.0
  %v382 = vmax.f32 %v378, 0.0
  %v383 = vmax.f32 %v379, 0.0
  %384 = vrot.lane.b32.xlu0 %v380, 16
  %v385 = vpop.permute.xlu0 %384
  %386 = vrot.lane.b32.xlu0 %v381, 16
  %v387 = vpop.permute.xlu0 %386
  %388 = vrot.lane.b32.xlu0 %v382, 16
  %v389 = vpop.permute.xlu0 %388
  %390 = vrot.lane.b32.xlu0 %v383, 16
  %v391 = vpop.permute.xlu0 %390
  %v392 = vsel %vm104, %v389, %v391
  %v393 = vsel %vm104, %v387, %v389
  %v394 = vsel %vm104, %v385, %v387
  %v395 = vsel %vm104, %v391, %v385
  %396 = vrot.lane.b32.xlu0 %v380, 112
  %v397 = vpop.permute.xlu0 %396
  %398 = vrot.lane.b32.xlu0 %v381, 112
  %v399 = vpop.permute.xlu0 %398
  %400 = vrot.lane.b32.xlu0 %v382, 112
  %v401 = vpop.permute.xlu0 %400
  %402 = vrot.lane.b32.xlu0 %v383, 112
  %v403 = vpop.permute.xlu0 %402
  %v404 = vsel %vm117, %v401, %v403
  %v405 = vsel %vm117, %v399, %v401
  %v406 = vsel %vm117, %v397, %v399
  %v407 = vsel %vm117, %v403, %v397
  %v408 = vsel %vm84, %v406, %v395
  %v409 = vsel %vm85, %v405, %v394
  %v410 = vsel %vm86, %v404, %v393
  %v411 = vsel %vm87, %v407, %v392
  %v412 = vsel %vm92, %v395, %v406
  %v413 = vsel %vm93, %v394, %v405
  %v414 = vsel %vm94, %v393, %v404
  %v415 = vsel %vm95, %v392, %v407
  %416 = vrot.lane.b32.xlu0 %v408, 1
  %v417 = vpop.permute.xlu0 %416
  %418 = vrot.lane.b32.xlu0 %v409, 1
  %v419 = vpop.permute.xlu0 %418
  %420 = vrot.lane.b32.xlu0 %v410, 1
  %v421 = vpop.permute.xlu0 %420
  %422 = vrot.lane.b32.xlu0 %v411, 1
  %v423 = vpop.permute.xlu0 %422
  %v424 = vsel %vm138, %v421, %v423
  %v425 = vsel %vm138, %v419, %v421
  %v426 = vsel %vm138, %v417, %v419
  %v427 = vsel %vm138, %v423, %v417
  %428 = vrot.lane.b32.xlu0 %v408, 127
  %v429 = vpop.permute.xlu0 %428
  %430 = vrot.lane.b32.xlu0 %v409, 127
  %v431 = vpop.permute.xlu0 %430
  %432 = vrot.lane.b32.xlu0 %v410, 127
  %v433 = vpop.permute.xlu0 %432
  %434 = vrot.lane.b32.xlu0 %v411, 127
  %v435 = vpop.permute.xlu0 %434
  %v436 = vsel %vm151, %v433, %v435
  %v437 = vsel %vm151, %v431, %v433
  %v438 = vsel %vm151, %v429, %v431
  %v439 = vsel %vm151, %v435, %v429
  %v440 = vsel %vm68, %v438, %v427
  %v441 = vsel %vm69, %v437, %v426
  %v442 = vsel %vm70, %v436, %v425
  %v443 = vsel %vm71, %v439, %v424
  %v444 = vsel %vm76, %v427, %v438
  %v445 = vsel %vm77, %v426, %v437
  %v446 = vsel %vm78, %v425, %v436
  %v447 = vsel %vm79, %v424, %v439
  %448 = vrot.lane.b32.xlu0 %v380, 1
  %v449 = vpop.permute.xlu0 %448
  %450 = vrot.lane.b32.xlu0 %v381, 1
  %v451 = vpop.permute.xlu0 %450
  %452 = vrot.lane.b32.xlu0 %v382, 1
  %v453 = vpop.permute.xlu0 %452
  %454 = vrot.lane.b32.xlu0 %v383, 1
  %v455 = vpop.permute.xlu0 %454
  %v456 = vsel %vm138, %v453, %v455
  %v457 = vsel %vm138, %v451, %v453
  %v458 = vsel %vm138, %v449, %v451
  %v459 = vsel %vm138, %v455, %v449
  %460 = vrot.lane.b32.xlu0 %v380, 127
  %v461 = vpop.permute.xlu0 %460
  %462 = vrot.lane.b32.xlu0 %v381, 127
  %v463 = vpop.permute.xlu0 %462
  %464 = vrot.lane.b32.xlu0 %v382, 127
  %v465 = vpop.permute.xlu0 %464
  %466 = vrot.lane.b32.xlu0 %v383, 127
  %v467 = vpop.permute.xlu0 %466
  %v468 = vsel %vm151, %v465, %v467
  %v469 = vsel %vm151, %v463, %v465
  %v470 = vsel %vm151, %v461, %v463
  %v471 = vsel %vm151, %v467, %v461
  %v472 = vsel %vm68, %v470, %v459
  %v473 = vsel %vm69, %v469, %v458
  %v474 = vsel %vm70, %v468, %v457
  %v475 = vsel %vm71, %v471, %v456
  %v476 = vsel %vm76, %v459, %v470
  %v477 = vsel %vm77, %v458, %v469
  %v478 = vsel %vm78, %v457, %v468
  %v479 = vsel %vm79, %v456, %v471
  %480 = vrot.lane.b32.xlu0 %v412, 1
  %v481 = vpop.permute.xlu0 %480
  %482 = vrot.lane.b32.xlu0 %v413, 1
  %v483 = vpop.permute.xlu0 %482
  %484 = vrot.lane.b32.xlu0 %v414, 1
  %v485 = vpop.permute.xlu0 %484
  %486 = vrot.lane.b32.xlu0 %v415, 1
  %v487 = vpop.permute.xlu0 %486
  %v488 = vsel %vm138, %v485, %v487
  %v489 = vsel %vm138, %v483, %v485
  %v490 = vsel %vm138, %v481, %v483
  %v491 = vsel %vm138, %v487, %v481
  %492 = vrot.lane.b32.xlu0 %v412, 127
  %v493 = vpop.permute.xlu0 %492
  %494 = vrot.lane.b32.xlu0 %v413, 127
  %v495 = vpop.permute.xlu0 %494
  %496 = vrot.lane.b32.xlu0 %v414, 127
  %v497 = vpop.permute.xlu0 %496
  %498 = vrot.lane.b32.xlu0 %v415, 127
  %v499 = vpop.permute.xlu0 %498
  %v500 = vsel %vm151, %v497, %v499
  %v501 = vsel %vm151, %v495, %v497
  %v502 = vsel %vm151, %v493, %v495
  %v503 = vsel %vm151, %v499, %v493
  %v504 = vsel %vm68, %v502, %v491
  %v505 = vsel %vm69, %v501, %v490
  %v506 = vsel %vm70, %v500, %v489
  %v507 = vsel %vm71, %v503, %v488
  %v508 = vsel %vm76, %v491, %v502
  %v509 = vsel %vm77, %v490, %v501
  %v510 = vsel %vm78, %v489, %v500
  %v511 = vsel %vm79, %v488, %v503
  %v512 = vld [vmem:[%s2] sm:$0xf]
  %v513 = vpack.c.bf16 %v408, %v440
  %v514 = vpack.c.bf16 %v409, %v441
  %v515 = vpack.c.bf16 %v410, %v442
  %v516 = vpack.c.bf16 %v411, %v443
  %v517 = vpack.c.bf16 %v472, %v444
  %v518 = vpack.c.bf16 %v473, %v445
  %v519 = vpack.c.bf16 %v474, %v446
  %v520 = vpack.c.bf16 %v475, %v447
  %v521 = vpack.c.bf16 %v476, %v380
  %v522 = vpack.c.bf16 %v477, %v381
  %v523 = vpack.c.bf16 %v478, %v382
  %v524 = vpack.c.bf16 %v479, %v383
  %v525 = vpack.c.bf16 %v412, %v504
  %v526 = vpack.c.bf16 %v413, %v505
  %v527 = vpack.c.bf16 %v414, %v506
  %v528 = vpack.c.bf16 %v415, %v507
  %v529 = vpack.c.bf16 %v508, %v508
  %v530 = vpack.c.bf16 %v509, %v509
  %v531 = vpack.c.bf16 %v510, %v510
  %v532 = vpack.c.bf16 %v511, %v511
  %v534 = vsel %vm255, %v512, 0
  %v537 = vsel %vm259, %v529, 0
  %v540 = vsel %vm259, %v530, 0
  %v543 = vsel %vm259, %v531, 0
  %v546 = vsel %vm259, %v532, 0
  %548 = vmatpush.bf16.msra.mxu0 0
  %549 = vmatpush.bf16.msra.mxu0 0
  %550 = vmatpush.bf16.msra.mxu0 0
  %551 = vmatpush.bf16.msra.mxu0 %v537
  %552 = vmatpush.bf16.msra.mxu0 %v525
  %553 = vmatpush.bf16.msra.mxu0 %v521
  %554 = vmatpush.bf16.msra.mxu0 %v517
  %555 = vmatpush.bf16.msra.mxu0 %v513
  %556 = vmatmul.bf16.gmra.mxu0 %v534
  %v557 = vpop.f32.mrf.mxu0
  %v558 = vadd.f32 0.0, %v557
  %v559 = vpop.f32.mrf.mxu0
  %560 = vdwg.mxu0
  %561 = vmatpush.bf16.msra.mxu0 0
  %562 = vmatpush.bf16.msra.mxu0 0
  %563 = vmatpush.bf16.msra.mxu0 0
  %564 = vmatpush.bf16.msra.mxu0 %v540
  %565 = vmatpush.bf16.msra.mxu0 %v526
  %566 = vmatpush.bf16.msra.mxu0 %v522
  %567 = vmatpush.bf16.msra.mxu0 %v518
  %568 = vmatpush.bf16.msra.mxu0 %v514
  %569 = vmatmul.bf16.gmra.mxu0 %v534
  %v570 = vpop.f32.mrf.mxu0
  %v571 = vadd.f32 0.0, %v570
  %v572 = vpop.f32.mrf.mxu0
  %573 = vdwg.mxu0
  %574 = vmatpush.bf16.msra.mxu0 0
  %575 = vmatpush.bf16.msra.mxu0 0
  %576 = vmatpush.bf16.msra.mxu0 0
  %577 = vmatpush.bf16.msra.mxu0 %v543
  %578 = vmatpush.bf16.msra.mxu0 %v527
  %579 = vmatpush.bf16.msra.mxu0 %v523
  %580 = vmatpush.bf16.msra.mxu0 %v519
  %581 = vmatpush.bf16.msra.mxu0 %v515
  %582 = vmatmul.bf16.gmra.mxu0 %v534
  %v583 = vpop.f32.mrf.mxu0
  %v584 = vadd.f32 0.0, %v583
  %v585 = vpop.f32.mrf.mxu0
  %586 = vdwg.mxu0
  %587 = vmatpush.bf16.msra.mxu0 0
  %588 = vmatpush.bf16.msra.mxu0 0
  %589 = vmatpush.bf16.msra.mxu0 0
  %590 = vmatpush.bf16.msra.mxu0 %v546
  %591 = vmatpush.bf16.msra.mxu0 %v528
  %592 = vmatpush.bf16.msra.mxu0 %v524
  %593 = vmatpush.bf16.msra.mxu0 %v520
  %594 = vmatpush.bf16.msra.mxu0 %v516
  %595 = vmatmul.bf16.gmra.mxu0 %v534
  %v596 = vpop.f32.mrf.mxu0
  %v597 = vadd.f32 0.0, %v596
  %v598 = vpop.f32.mrf.mxu0
  %599 = vdwg.mxu0
  %v600 = vld [vmem:[%s5] sm:$0xff]
  %v601 = vld [vmem:[%s6] sm:$0xff]
  %v602 = vmul.f32 %v558, %v558
  %v603 = vmul.f32 %v571, %v571
  %v604 = vmul.f32 %v584, %v584
  %v605 = vmul.f32 %v597, %v597
  %v606 = vadd.f32 %v558, %v571
  %v607 = vadd.f32 %v606, %v584
  %v608 = vadd.f32 %v607, %v597
  %609 = vadd.xlane.f32.xlu0 %v608
  %v610 = vpop.xlane.xlu0 %609
  %v611 = vadd.f32 %v602, %v603
  %v612 = vadd.f32 %v611, %v604
  %v613 = vadd.f32 %v612, %v605
  %614 = vadd.xlane.f32.xlu0 %v613
  %v615 = vpop.xlane.xlu0 %614
  %v616 = vmul.f32 %v610, 0.001953125
  %v617 = vmul.f32 %v615, 0.001953125
  %v618 = vmul.f32 %v616, %v616
  %v619 = vsub.f32 %v617, %v618
  %v620 = vadd.f32 %v619, 1e-05
  %v621 = vrsqrt.pop %v620
  %v622 = vmul.f32 %v621, %v620
  %v623 = vmul.f32 %v622, %v621
  %v624 = vmul.f32 0.5, %v623
  %v625 = vsub.f32 1.5, %v624
  %v626 = vmul.f32 %v621, %v625
  %vm627 = vweird.f32 %v620
  %vm628 = vweird.f32 %v621
  %vm629 = vmor %vm627, %vm628
  %v630 = vsel %vm629, %v621, %v626
  %v631 = vmul.f32 %v600, %v630
  %v632 = vmul.f32 %v616, %v631
  %v633 = vsub.f32 %v601, %v632
  %635 = vset.pattern.permute.xlu0 0
  %636 = vperm.xlu0 %635, %v631
  %v637 = vpop.permute.xlu0 %636
  %v639 = vmul.f32 %v558, %v637
  %v640 = vmul.f32 %v571, %v637
  %v641 = vmul.f32 %v584, %v637
  %v642 = vmul.f32 %v597, %v637
  %644 = vset.pattern.permute.xlu0 0
  %645 = vperm.xlu0 %644, %v633
  %v646 = vpop.permute.xlu0 %645
  %v648 = vadd.f32 %v639, %v646
  %v649 = vadd.f32 %v640, %v646
  %v650 = vadd.f32 %v641, %v646
  %v651 = vadd.f32 %v642, %v646
  %v652 = vadd.f32 %v648, %v284
  %v653 = vadd.f32 %v649, %v298
  %v654 = vadd.f32 %v650, %v312
  %v655 = vadd.f32 %v651, %v326
  %v656 = vmax.f32 %v652, 0.0
  %v657 = vmax.f32 %v653, 0.0
  %v658 = vmax.f32 %v654, 0.0
  %v659 = vmax.f32 %v655, 0.0
  %660 = vst [vmem:[%s7] sm:$0xff] %v656
  %661 = vst [vmem:[%s7 + $0x8] sm:$0xff] %v657
  %662 = vst [vmem:[%s7 + $0x10] sm:$0xff] %v658
  %663 = vst [vmem:[%s7 + $0x18] sm:$0xff] %v659
  // Predicated region
  $region30: #{resblock_forward.1} parent=0 // pred_check
    _
  $region31: #{resblock_forward.1} parent=0 // pred_check_branch
    %665 = sbr.rel (0) target = $region33
  $region32: #{resblock_forward.1} parent=0 // pred_region
    _
  $region33: #{resblock_forward.1} parent=0 // pred_fallthru
    _
  // Predicated region
  $region34: #{resblock_forward.1} parent=0 // pred_check
    _
  $region35: #{resblock_forward.1} parent=0 // pred_check_branch
    %667 = sbr.rel (0) target = $region37
  $region36: #{resblock_forward.1} parent=0 // pred_region
    _
  $region37: #{resblock_forward.1} parent=0 // pred_fallthru
    _

</llo_original>
